<compile_context>
chip_gen: v5e
topology: v5e:2x2
jax: 0.10.0
libtpu: 0.0.40
codegen_flags: <defaults>
</compile_context>

<pallas_src>
import functools

import jax
import jax.numpy as jnp
from jax.experimental import pallas as pl
from jax.experimental.pallas import tpu as pltpu

LN_EPS = 1e-5
MASK_VALUE = -1000000000.0


def _round_up(n, m):
    return (n + m - 1) // m * m


def action_head_kernel(x_ref, ln_g_ref, ln_b_ref, w_ref, b_ref,
                       ow_ref, ob_ref, mask_ref, o_ref, *, res_num):
    """Fused ResFC stack + output projection + masked fill, fully resident in VMEM."""
    x = x_ref[...].astype(jnp.float32)
    for r in range(res_num):                      # res_num is static -> unrolled
        residual = x
        h = x
        for j in range(2):                        # two fc_block2 per ResFCBlock2
            # single-pass LayerNorm: E[h], E[h^2]
            mean = jnp.mean(h, axis=-1, keepdims=True)
            mean_sq = jnp.mean(h * h, axis=-1, keepdims=True)
            var = mean_sq - mean * mean
            hn = (h - mean) * jax.lax.rsqrt(var + LN_EPS)
            hn = hn * ln_g_ref[r, j] + ln_b_ref[r, j]
            hn = jnp.maximum(hn, 0.0)             # ReLU (pre-activation)
            # bf16 MXU operands, f32 accumulation; bias add in f32
            h = jnp.dot(hn.astype(jnp.bfloat16), w_ref[r, j],
                        preferred_element_type=jnp.float32) + b_ref[r, j]
        x = h + residual
    out = jnp.dot(x.astype(jnp.bfloat16), ow_ref[...],
                  preferred_element_type=jnp.float32) + ob_ref[...]
    # masked_fill_(mask.bool(), -1e9)  (functional equivalent)
    out = jnp.where(mask_ref[...] != 0, MASK_VALUE, out)
    o_ref[...] = out.astype(o_ref.dtype)


def action_head_forward(x, params, mask, *, block_b=None):
    B, D = x.shape
    O = params["ow"].shape[1]
    res_num = params["w"].shape[0]

    # ---- batch tiling: large row tiles; >=2 parallel steps when B allows (v7x megacore)
    b32 = _round_up(B, 32)
    if block_b is None:
        if b32 <= 32:
            block_b = b32
        elif b32 <= 256:
            block_b = _round_up(b32 // 2, 32)
        else:
            block_b = 128
    assert block_b % 32 == 0
    B_pad = _round_up(b32, block_b)

    # ---- lane-dense output: pad out_dim up to a multiple of 128, slice afterwards
    O_pad = _round_up(O, 128)

    x_p = jnp.pad(x, ((0, B_pad - B), (0, 0)))
    mask_p = jnp.pad(mask.astype(jnp.int8),
                     ((0, B_pad - B), (0, O_pad - O)), constant_values=1)
    ow_p = jnp.pad(params["ow"], ((0, 0), (0, O_pad - O))).astype(jnp.bfloat16)
    ob_p = jnp.pad(params["ob"], ((0, 0), (0, O_pad - O)))
    w_bf16 = params["w"].astype(jnp.bfloat16)

    grid = (B_pad // block_b,)

    def full_spec(arr):
        nd = arr.ndim
        return pl.BlockSpec(arr.shape, lambda i, _nd=nd: (0,) * _nd)

    # VMEM budget: resident (double-buffered) weight stack + per-step tiles + headroom.
    weight_bytes = (w_bf16.size * 2 + ow_p.size * 2 +
                    params["ln_g"].size * 4 + params["ln_b"].size * 4 +
                    params["b"].size * 4 + ob_p.size * 4)
    act_bytes = (block_b * D * x.dtype.itemsize +
                 block_b * O_pad * (1 + x.dtype.itemsize))
    vmem_limit = 2 * (weight_bytes + act_bytes) + (8 << 20)
    vmem_limit = int(min(max(vmem_limit, 32 << 20), 100 << 20))
    # NOTE: for very large D/res_num on v7x (64 MiB VMEM), the weight stack should be
    # streamed as (1, 2, D, D) tiles over an extra "arbitrary" grid axis instead of
    # being kept fully resident via full_spec.

    kernel = functools.partial(action_head_kernel, res_num=res_num)
    out = pl.pallas_call(
        kernel,
        out_shape=jax.ShapeDtypeStruct((B_pad, O_pad), x.dtype),
        grid=grid,
        in_specs=[
            pl.BlockSpec((block_b, D), lambda i: (i, 0)),      # x, tiled over batch
            full_spec(params["ln_g"]),
            full_spec(params["ln_b"]),
            full_spec(w_bf16),
            full_spec(params["b"]),
            full_spec(ow_p),
            full_spec(ob_p),
            pl.BlockSpec((block_b, O_pad), lambda i: (i, 0)),  # mask (int8), tiled
        ],
        out_specs=pl.BlockSpec((block_b, O_pad), lambda i: (i, 0)),
        compiler_params=pltpu.CompilerParams(
            dimension_semantics=("parallel",),
            vmem_limit_bytes=vmem_limit),
    )(x_p, params["ln_g"], params["ln_b"], w_bf16, params["b"],
      ow_p, ob_p, mask_p)
    return out[:B, :O]


def reference_forward(x, params, mask):
    """Pure-JAX reference mirroring the PyTorch forward (same bf16 MXU precision)."""
    x = x.astype(jnp.float32)
    res_num = params["w"].shape[0]
    w = params["w"].astype(jnp.bfloat16)
    ow = params["ow"].astype(jnp.bfloat16)
    for r in range(res_num):
        residual = x
        h = x
        for j in range(2):
            mean = jnp.mean(h, axis=-1, keepdims=True)
            var = jnp.mean(jnp.square(h - mean), axis=-1, keepdims=True)
            hn = (h - mean) * jax.lax.rsqrt(var + LN_EPS)
            hn = hn * params["ln_g"][r, j] + params["ln_b"][r, j]
            hn = jnp.maximum(hn, 0.0)
            h = jnp.dot(hn.astype(jnp.bfloat16), w[r, j],
                        preferred_element_type=jnp.float32) + params["b"][r, j]
        x = h + residual
    out = jnp.dot(x.astype(jnp.bfloat16), ow,
                  preferred_element_type=jnp.float32) + params["ob"]
    return jnp.where(mask != 0, MASK_VALUE, out)


def init_params(key, embedding_dim, res_num, out_dim):
    D, O = embedding_dim, out_dim
    k = jax.random.split(key, 4)
    scale = 1.0 / jnp.sqrt(D)
    return {
        # LayerNorm affine params for (res_num blocks) x (2 fc_block2 each)
        "ln_g": jnp.ones((res_num, 2, 1, D), jnp.float32),
        "ln_b": jnp.zeros((res_num, 2, 1, D), jnp.float32),
        # Linear weights stored [in, out] (transposed vs PyTorch nn.Linear)
        "w": jax.random.uniform(k[0], (res_num, 2, D, D), jnp.float32, -scale, scale),
        "b": jax.random.uniform(k[1], (res_num, 2, 1, D), jnp.float32, -scale, scale),
        # output_layer = fc_block2(D, O, norm=None, act=None) == plain Linear
        "ow": jax.random.uniform(k[2], (D, O), jnp.float32, -scale, scale),
        "ob": jax.random.uniform(k[3], (1, O), jnp.float32, -scale, scale),
    }


if __name__ == "__main__":
    # Small but representative shapes: ragged batch (tests padding) and a
    # non-128-multiple out_dim (tests lane padding), D on the lane width.
    B, D, O, RES_NUM = 12, 128, 200, 2
    key = jax.random.PRNGKey(0)
    kx, km, kp = jax.random.split(key, 3)

    x = jax.random.normal(kx, (B, D), jnp.float32)
    mask = jax.random.bernoulli(km, 0.1, (B, O)).astype(jnp.int32)
    params = init_params(kp, D, RES_NUM, O)

    out = action_head_forward(x, params, mask)
    out = jax.block_until_ready(out)

    ref = reference_forward(x, params, mask)
    assert out.shape == (B, O)
    assert jnp.allclose(out, ref, rtol=1e-2, atol=5e-3), "mismatch vs JAX reference"

    print("KERNEL_OK")
</pallas_src>

<mosaic_0001>
module attributes {stable_mosaic.version = 11 : i64} {
  func.func @action_head_kernel(%arg0: i32, %arg1: memref<32x128xf32, #tpu.memory_space<vmem>>, %arg2: memref<2x2x1x128xf32, #tpu.memory_space<vmem>>, %arg3: memref<2x2x1x128xf32, #tpu.memory_space<vmem>>, %arg4: memref<2x2x128x128xbf16, #tpu.memory_space<vmem>>, %arg5: memref<2x2x1x128xf32, #tpu.memory_space<vmem>>, %arg6: memref<128x256xbf16, #tpu.memory_space<vmem>>, %arg7: memref<1x256xf32, #tpu.memory_space<vmem>>, %arg8: memref<32x256xi8, #tpu.memory_space<vmem>>, %arg9: memref<32x256xf32, #tpu.memory_space<vmem>>) attributes {dimension_semantics = [#tpu.dimension_semantics<parallel>], iteration_bounds = array<i64: 1>, scalar_prefetch = 0 : i64, scratch_operands = 0 : i64, tpu.core_type = #tpu.core_type<tc>, window_params = [{transform_indices = @transform_0, window_bounds = array<i64: 32, 128>}, {pipeline_mode = #tpu.pipeline_mode<synchronous>, transform_indices = @transform_1, window_bounds = array<i64: 2, 2, 1, 128>}, {pipeline_mode = #tpu.pipeline_mode<synchronous>, transform_indices = @transform_2, window_bounds = array<i64: 2, 2, 1, 128>}, {pipeline_mode = #tpu.pipeline_mode<synchronous>, transform_indices = @transform_3, window_bounds = array<i64: 2, 2, 128, 128>}, {pipeline_mode = #tpu.pipeline_mode<synchronous>, transform_indices = @transform_4, window_bounds = array<i64: 2, 2, 1, 128>}, {pipeline_mode = #tpu.pipeline_mode<synchronous>, transform_indices = @transform_5, window_bounds = array<i64: 128, 256>}, {pipeline_mode = #tpu.pipeline_mode<synchronous>, transform_indices = @transform_6, window_bounds = array<i64: 1, 256>}, {transform_indices = @transform_7, window_bounds = array<i64: 32, 256>}, {transform_indices = @transform_8, window_bounds = array<i64: 32, 256>}]} {
    %c0 = arith.constant 0 : index
    %c0_0 = arith.constant 0 : index
    %0 = vector.load %arg1[%c0, %c0_0] : memref<32x128xf32, #tpu.memory_space<vmem>>, vector<32x128xf32>
    %cst = arith.constant dense<0.000000e+00> : vector<32xf32>
    %1 = vector.multi_reduction <add>, %0, %cst [1] : vector<32x128xf32> to vector<32xf32>
    %2 = vector.shape_cast %1 : vector<32xf32> to vector<32x1xf32>
    %cst_1 = arith.constant 1.280000e+02 : f32
    %3 = vector.broadcast %cst_1 : f32 to vector<32x1xf32>
    %4 = arith.divf %2, %3 : vector<32x1xf32>
    %5 = arith.mulf %0, %0 : vector<32x128xf32>
    %cst_2 = arith.constant dense<0.000000e+00> : vector<32xf32>
    %6 = vector.multi_reduction <add>, %5, %cst_2 [1] : vector<32x128xf32> to vector<32xf32>
    %7 = vector.shape_cast %6 : vector<32xf32> to vector<32x1xf32>
    %cst_3 = arith.constant 1.280000e+02 : f32
    %8 = vector.broadcast %cst_3 : f32 to vector<32x1xf32>
    %9 = arith.divf %7, %8 : vector<32x1xf32>
    %10 = arith.mulf %4, %4 : vector<32x1xf32>
    %11 = arith.subf %9, %10 : vector<32x1xf32>
    %12 = vector.broadcast %4 : vector<32x1xf32> to vector<32x128xf32>
    %13 = arith.subf %0, %12 : vector<32x128xf32>
    %cst_4 = arith.constant 9.99999974E-6 : f32
    %14 = vector.broadcast %cst_4 : f32 to vector<32x1xf32>
    %15 = arith.addf %11, %14 : vector<32x1xf32>
    %16 = math.rsqrt %15 : vector<32x1xf32>
    %17 = vector.broadcast %16 : vector<32x1xf32> to vector<32x128xf32>
    %18 = arith.mulf %13, %17 : vector<32x128xf32>
    %c0_5 = arith.constant 0 : index
    %c0_6 = arith.constant 0 : index
    %c0_7 = arith.constant 0 : index
    %c0_8 = arith.constant 0 : index
    %19 = vector.load %arg2[%c0_5, %c0_6, %c0_7, %c0_8] : memref<2x2x1x128xf32, #tpu.memory_space<vmem>>, vector<1x1x1x128xf32>
    %20 = vector.shape_cast %19 : vector<1x1x1x128xf32> to vector<1x128xf32>
    %21 = vector.broadcast %20 : vector<1x128xf32> to vector<32x128xf32>
    %22 = arith.mulf %18, %21 : vector<32x128xf32>
    %c0_9 = arith.constant 0 : index
    %c0_10 = arith.constant 0 : index
    %c0_11 = arith.constant 0 : index
    %c0_12 = arith.constant 0 : index
    %23 = vector.load %arg3[%c0_9, %c0_10, %c0_11, %c0_12] : memref<2x2x1x128xf32, #tpu.memory_space<vmem>>, vector<1x1x1x128xf32>
    %24 = vector.shape_cast %23 : vector<1x1x1x128xf32> to vector<1x128xf32>
    %25 = vector.broadcast %24 : vector<1x128xf32> to vector<32x128xf32>
    %26 = arith.addf %22, %25 : vector<32x128xf32>
    %cst_13 = arith.constant 0.000000e+00 : f32
    %27 = vector.broadcast %cst_13 : f32 to vector<32x128xf32>
    %28 = arith.maximumf %26, %27 : vector<32x128xf32>
    %29 = arith.truncf %28 : vector<32x128xf32> to vector<32x128xbf16>
    %c0_14 = arith.constant 0 : index
    %c0_15 = arith.constant 0 : index
    %c0_16 = arith.constant 0 : index
    %c0_17 = arith.constant 0 : index
    %30 = vector.load %arg4[%c0_14, %c0_15, %c0_16, %c0_17] : memref<2x2x128x128xbf16, #tpu.memory_space<vmem>>, vector<1x1x128x128xbf16>
    %31 = vector.shape_cast %30 : vector<1x1x128x128xbf16> to vector<128x128xbf16>
    %cst_18 = arith.constant dense<0.000000e+00> : vector<32x128xf32>
    %32 = tpu.matmul %29, %31, %cst_18 {dimension_numbers = #tpu.dot_dimension_numbers<[1], [0], [0], [1], [0, 0, 1, 1], [], []>} : vector<32x128xbf16>, vector<128x128xbf16>, vector<32x128xf32> -> vector<32x128xf32>
    %c0_19 = arith.constant 0 : index
    %c0_20 = arith.constant 0 : index
    %c0_21 = arith.constant 0 : index
    %c0_22 = arith.constant 0 : index
    %33 = vector.load %arg5[%c0_19, %c0_20, %c0_21, %c0_22] : memref<2x2x1x128xf32, #tpu.memory_space<vmem>>, vector<1x1x1x128xf32>
    %34 = vector.shape_cast %33 : vector<1x1x1x128xf32> to vector<1x128xf32>
    %35 = vector.broadcast %34 : vector<1x128xf32> to vector<32x128xf32>
    %36 = arith.addf %32, %35 : vector<32x128xf32>
    %cst_23 = arith.constant dense<0.000000e+00> : vector<32xf32>
    %37 = vector.multi_reduction <add>, %36, %cst_23 [1] : vector<32x128xf32> to vector<32xf32>
    %38 = vector.shape_cast %37 : vector<32xf32> to vector<32x1xf32>
    %cst_24 = arith.constant 1.280000e+02 : f32
    %39 = vector.broadcast %cst_24 : f32 to vector<32x1xf32>
    %40 = arith.divf %38, %39 : vector<32x1xf32>
    %41 = arith.mulf %36, %36 : vector<32x128xf32>
    %cst_25 = arith.constant dense<0.000000e+00> : vector<32xf32>
    %42 = vector.multi_reduction <add>, %41, %cst_25 [1] : vector<32x128xf32> to vector<32xf32>
    %43 = vector.shape_cast %42 : vector<32xf32> to vector<32x1xf32>
    %cst_26 = arith.constant 1.280000e+02 : f32
    %44 = vector.broadcast %cst_26 : f32 to vector<32x1xf32>
    %45 = arith.divf %43, %44 : vector<32x1xf32>
    %46 = arith.mulf %40, %40 : vector<32x1xf32>
    %47 = arith.subf %45, %46 : vector<32x1xf32>
    %48 = vector.broadcast %40 : vector<32x1xf32> to vector<32x128xf32>
    %49 = arith.subf %36, %48 : vector<32x128xf32>
    %cst_27 = arith.constant 9.99999974E-6 : f32
    %50 = vector.broadcast %cst_27 : f32 to vector<32x1xf32>
    %51 = arith.addf %47, %50 : vector<32x1xf32>
    %52 = math.rsqrt %51 : vector<32x1xf32>
    %53 = vector.broadcast %52 : vector<32x1xf32> to vector<32x128xf32>
    %54 = arith.mulf %49, %53 : vector<32x128xf32>
    %c0_28 = arith.constant 0 : index
    %c1 = arith.constant 1 : index
    %c0_29 = arith.constant 0 : index
    %c0_30 = arith.constant 0 : index
    %55 = vector.load %arg2[%c0_28, %c1, %c0_29, %c0_30] : memref<2x2x1x128xf32, #tpu.memory_space<vmem>>, vector<1x1x1x128xf32>
    %56 = vector.shape_cast %55 : vector<1x1x1x128xf32> to vector<1x128xf32>
    %57 = vector.broadcast %56 : vector<1x128xf32> to vector<32x128xf32>
    %58 = arith.mulf %54, %57 : vector<32x128xf32>
    %c0_31 = arith.constant 0 : index
    %c1_32 = arith.constant 1 : index
    %c0_33 = arith.constant 0 : index
    %c0_34 = arith.constant 0 : index
    %59 = vector.load %arg3[%c0_31, %c1_32, %c0_33, %c0_34] : memref<2x2x1x128xf32, #tpu.memory_space<vmem>>, vector<1x1x1x128xf32>
    %60 = vector.shape_cast %59 : vector<1x1x1x128xf32> to vector<1x128xf32>
    %61 = vector.broadcast %60 : vector<1x128xf32> to vector<32x128xf32>
    %62 = arith.addf %58, %61 : vector<32x128xf32>
    %cst_35 = arith.constant 0.000000e+00 : f32
    %63 = vector.broadcast %cst_35 : f32 to vector<32x128xf32>
    %64 = arith.maximumf %62, %63 : vector<32x128xf32>
    %65 = arith.truncf %64 : vector<32x128xf32> to vector<32x128xbf16>
    %c0_36 = arith.constant 0 : index
    %c1_37 = arith.constant 1 : index
    %c0_38 = arith.constant 0 : index
    %c0_39 = arith.constant 0 : index
    %66 = vector.load %arg4[%c0_36, %c1_37, %c0_38, %c0_39] : memref<2x2x128x128xbf16, #tpu.memory_space<vmem>>, vector<1x1x128x128xbf16>
    %67 = vector.shape_cast %66 : vector<1x1x128x128xbf16> to vector<128x128xbf16>
    %cst_40 = arith.constant dense<0.000000e+00> : vector<32x128xf32>
    %68 = tpu.matmul %65, %67, %cst_40 {dimension_numbers = #tpu.dot_dimension_numbers<[1], [0], [0], [1], [0, 0, 1, 1], [], []>} : vector<32x128xbf16>, vector<128x128xbf16>, vector<32x128xf32> -> vector<32x128xf32>
    %c0_41 = arith.constant 0 : index
    %c1_42 = arith.constant 1 : index
    %c0_43 = arith.constant 0 : index
    %c0_44 = arith.constant 0 : index
    %69 = vector.load %arg5[%c0_41, %c1_42, %c0_43, %c0_44] : memref<2x2x1x128xf32, #tpu.memory_space<vmem>>, vector<1x1x1x128xf32>
    %70 = vector.shape_cast %69 : vector<1x1x1x128xf32> to vector<1x128xf32>
    %71 = vector.broadcast %70 : vector<1x128xf32> to vector<32x128xf32>
    %72 = arith.addf %68, %71 : vector<32x128xf32>
    %73 = arith.addf %72, %0 : vector<32x128xf32>
    %cst_45 = arith.constant dense<0.000000e+00> : vector<32xf32>
    %74 = vector.multi_reduction <add>, %73, %cst_45 [1] : vector<32x128xf32> to vector<32xf32>
    %75 = vector.shape_cast %74 : vector<32xf32> to vector<32x1xf32>
    %cst_46 = arith.constant 1.280000e+02 : f32
    %76 = vector.broadcast %cst_46 : f32 to vector<32x1xf32>
    %77 = arith.divf %75, %76 : vector<32x1xf32>
    %78 = arith.mulf %73, %73 : vector<32x128xf32>
    %cst_47 = arith.constant dense<0.000000e+00> : vector<32xf32>
    %79 = vector.multi_reduction <add>, %78, %cst_47 [1] : vector<32x128xf32> to vector<32xf32>
    %80 = vector.shape_cast %79 : vector<32xf32> to vector<32x1xf32>
    %cst_48 = arith.constant 1.280000e+02 : f32
    %81 = vector.broadcast %cst_48 : f32 to vector<32x1xf32>
    %82 = arith.divf %80, %81 : vector<32x1xf32>
    %83 = arith.mulf %77, %77 : vector<32x1xf32>
    %84 = arith.subf %82, %83 : vector<32x1xf32>
    %85 = vector.broadcast %77 : vector<32x1xf32> to vector<32x128xf32>
    %86 = arith.subf %73, %85 : vector<32x128xf32>
    %cst_49 = arith.constant 9.99999974E-6 : f32
    %87 = vector.broadcast %cst_49 : f32 to vector<32x1xf32>
    %88 = arith.addf %84, %87 : vector<32x1xf32>
    %89 = math.rsqrt %88 : vector<32x1xf32>
    %90 = vector.broadcast %89 : vector<32x1xf32> to vector<32x128xf32>
    %91 = arith.mulf %86, %90 : vector<32x128xf32>
    %c1_50 = arith.constant 1 : index
    %c0_51 = arith.constant 0 : index
    %c0_52 = arith.constant 0 : index
    %c0_53 = arith.constant 0 : index
    %92 = vector.load %arg2[%c1_50, %c0_51, %c0_52, %c0_53] : memref<2x2x1x128xf32, #tpu.memory_space<vmem>>, vector<1x1x1x128xf32>
    %93 = vector.shape_cast %92 : vector<1x1x1x128xf32> to vector<1x128xf32>
    %94 = vector.broadcast %93 : vector<1x128xf32> to vector<32x128xf32>
    %95 = arith.mulf %91, %94 : vector<32x128xf32>
    %c1_54 = arith.constant 1 : index
    %c0_55 = arith.constant 0 : index
    %c0_56 = arith.constant 0 : index
    %c0_57 = arith.constant 0 : index
    %96 = vector.load %arg3[%c1_54, %c0_55, %c0_56, %c0_57] : memref<2x2x1x128xf32, #tpu.memory_space<vmem>>, vector<1x1x1x128xf32>
    %97 = vector.shape_cast %96 : vector<1x1x1x128xf32> to vector<1x128xf32>
    %98 = vector.broadcast %97 : vector<1x128xf32> to vector<32x128xf32>
    %99 = arith.addf %95, %98 : vector<32x128xf32>
    %cst_58 = arith.constant 0.000000e+00 : f32
    %100 = vector.broadcast %cst_58 : f32 to vector<32x128xf32>
    %101 = arith.maximumf %99, %100 : vector<32x128xf32>
    %102 = arith.truncf %101 : vector<32x128xf32> to vector<32x128xbf16>
    %c1_59 = arith.constant 1 : index
    %c0_60 = arith.constant 0 : index
    %c0_61 = arith.constant 0 : index
    %c0_62 = arith.constant 0 : index
    %103 = vector.load %arg4[%c1_59, %c0_60, %c0_61, %c0_62] : memref<2x2x128x128xbf16, #tpu.memory_space<vmem>>, vector<1x1x128x128xbf16>
    %104 = vector.shape_cast %103 : vector<1x1x128x128xbf16> to vector<128x128xbf16>
    %cst_63 = arith.constant dense<0.000000e+00> : vector<32x128xf32>
    %105 = tpu.matmul %102, %104, %cst_63 {dimension_numbers = #tpu.dot_dimension_numbers<[1], [0], [0], [1], [0, 0, 1, 1], [], []>} : vector<32x128xbf16>, vector<128x128xbf16>, vector<32x128xf32> -> vector<32x128xf32>
    %c1_64 = arith.constant 1 : index
    %c0_65 = arith.constant 0 : index
    %c0_66 = arith.constant 0 : index
    %c0_67 = arith.constant 0 : index
    %106 = vector.load %arg5[%c1_64, %c0_65, %c0_66, %c0_67] : memref<2x2x1x128xf32, #tpu.memory_space<vmem>>, vector<1x1x1x128xf32>
    %107 = vector.shape_cast %106 : vector<1x1x1x128xf32> to vector<1x128xf32>
    %108 = vector.broadcast %107 : vector<1x128xf32> to vector<32x128xf32>
    %109 = arith.addf %105, %108 : vector<32x128xf32>
    %cst_68 = arith.constant dense<0.000000e+00> : vector<32xf32>
    %110 = vector.multi_reduction <add>, %109, %cst_68 [1] : vector<32x128xf32> to vector<32xf32>
    %111 = vector.shape_cast %110 : vector<32xf32> to vector<32x1xf32>
    %cst_69 = arith.constant 1.280000e+02 : f32
    %112 = vector.broadcast %cst_69 : f32 to vector<32x1xf32>
    %113 = arith.divf %111, %112 : vector<32x1xf32>
    %114 = arith.mulf %109, %109 : vector<32x128xf32>
    %cst_70 = arith.constant dense<0.000000e+00> : vector<32xf32>
    %115 = vector.multi_reduction <add>, %114, %cst_70 [1] : vector<32x128xf32> to vector<32xf32>
    %116 = vector.shape_cast %115 : vector<32xf32> to vector<32x1xf32>
    %cst_71 = arith.constant 1.280000e+02 : f32
    %117 = vector.broadcast %cst_71 : f32 to vector<32x1xf32>
    %118 = arith.divf %116, %117 : vector<32x1xf32>
    %119 = arith.mulf %113, %113 : vector<32x1xf32>
    %120 = arith.subf %118, %119 : vector<32x1xf32>
    %121 = vector.broadcast %113 : vector<32x1xf32> to vector<32x128xf32>
    %122 = arith.subf %109, %121 : vector<32x128xf32>
    %cst_72 = arith.constant 9.99999974E-6 : f32
    %123 = vector.broadcast %cst_72 : f32 to vector<32x1xf32>
    %124 = arith.addf %120, %123 : vector<32x1xf32>
    %125 = math.rsqrt %124 : vector<32x1xf32>
    %126 = vector.broadcast %125 : vector<32x1xf32> to vector<32x128xf32>
    %127 = arith.mulf %122, %126 : vector<32x128xf32>
    %c1_73 = arith.constant 1 : index
    %c1_74 = arith.constant 1 : index
    %c0_75 = arith.constant 0 : index
    %c0_76 = arith.constant 0 : index
    %128 = vector.load %arg2[%c1_73, %c1_74, %c0_75, %c0_76] : memref<2x2x1x128xf32, #tpu.memory_space<vmem>>, vector<1x1x1x128xf32>
    %129 = vector.shape_cast %128 : vector<1x1x1x128xf32> to vector<1x128xf32>
    %130 = vector.broadcast %129 : vector<1x128xf32> to vector<32x128xf32>
    %131 = arith.mulf %127, %130 : vector<32x128xf32>
    %c1_77 = arith.constant 1 : index
    %c1_78 = arith.constant 1 : index
    %c0_79 = arith.constant 0 : index
    %c0_80 = arith.constant 0 : index
    %132 = vector.load %arg3[%c1_77, %c1_78, %c0_79, %c0_80] : memref<2x2x1x128xf32, #tpu.memory_space<vmem>>, vector<1x1x1x128xf32>
    %133 = vector.shape_cast %132 : vector<1x1x1x128xf32> to vector<1x128xf32>
    %134 = vector.broadcast %133 : vector<1x128xf32> to vector<32x128xf32>
    %135 = arith.addf %131, %134 : vector<32x128xf32>
    %cst_81 = arith.constant 0.000000e+00 : f32
    %136 = vector.broadcast %cst_81 : f32 to vector<32x128xf32>
    %137 = arith.maximumf %135, %136 : vector<32x128xf32>
    %138 = arith.truncf %137 : vector<32x128xf32> to vector<32x128xbf16>
    %c1_82 = arith.constant 1 : index
    %c1_83 = arith.constant 1 : index
    %c0_84 = arith.constant 0 : index
    %c0_85 = arith.constant 0 : index
    %139 = vector.load %arg4[%c1_82, %c1_83, %c0_84, %c0_85] : memref<2x2x128x128xbf16, #tpu.memory_space<vmem>>, vector<1x1x128x128xbf16>
    %140 = vector.shape_cast %139 : vector<1x1x128x128xbf16> to vector<128x128xbf16>
    %cst_86 = arith.constant dense<0.000000e+00> : vector<32x128xf32>
    %141 = tpu.matmul %138, %140, %cst_86 {dimension_numbers = #tpu.dot_dimension_numbers<[1], [0], [0], [1], [0, 0, 1, 1], [], []>} : vector<32x128xbf16>, vector<128x128xbf16>, vector<32x128xf32> -> vector<32x128xf32>
    %c1_87 = arith.constant 1 : index
    %c1_88 = arith.constant 1 : index
    %c0_89 = arith.constant 0 : index
    %c0_90 = arith.constant 0 : index
    %142 = vector.load %arg5[%c1_87, %c1_88, %c0_89, %c0_90] : memref<2x2x1x128xf32, #tpu.memory_space<vmem>>, vector<1x1x1x128xf32>
    %143 = vector.shape_cast %142 : vector<1x1x1x128xf32> to vector<1x128xf32>
    %144 = vector.broadcast %143 : vector<1x128xf32> to vector<32x128xf32>
    %145 = arith.addf %141, %144 : vector<32x128xf32>
    %146 = arith.addf %145, %73 : vector<32x128xf32>
    %147 = arith.truncf %146 : vector<32x128xf32> to vector<32x128xbf16>
    %c0_91 = arith.constant 0 : index
    %c0_92 = arith.constant 0 : index
    %148 = vector.load %arg6[%c0_91, %c0_92] : memref<128x256xbf16, #tpu.memory_space<vmem>>, vector<128x256xbf16>
    %cst_93 = arith.constant dense<0.000000e+00> : vector<32x256xf32>
    %149 = tpu.matmul %147, %148, %cst_93 {dimension_numbers = #tpu.dot_dimension_numbers<[1], [0], [0], [1], [0, 0, 1, 1], [], []>} : vector<32x128xbf16>, vector<128x256xbf16>, vector<32x256xf32> -> vector<32x256xf32>
    %c0_94 = arith.constant 0 : index
    %c0_95 = arith.constant 0 : index
    %150 = vector.load %arg7[%c0_94, %c0_95] : memref<1x256xf32, #tpu.memory_space<vmem>>, vector<1x256xf32>
    %151 = vector.broadcast %150 : vector<1x256xf32> to vector<32x256xf32>
    %152 = arith.addf %149, %151 : vector<32x256xf32>
    %c0_96 = arith.constant 0 : index
    %c0_97 = arith.constant 0 : index
    %153 = vector.load %arg8[%c0_96, %c0_97] : memref<32x256xi8, #tpu.memory_space<vmem>>, vector<32x256xi8>
    %c0_i8 = arith.constant 0 : i8
    %154 = vector.broadcast %c0_i8 : i8 to vector<32x256xi8>
    %155 = arith.cmpi ne, %153, %154 : vector<32x256xi8>
    %cst_98 = arith.constant -1.000000e+09 : f32
    %156 = vector.broadcast %cst_98 : f32 to vector<32x256xf32>
    %157 = arith.select %155, %156, %152 : vector<32x256xi1>, vector<32x256xf32>
    %c0_99 = arith.constant 0 : index
    %c0_100 = arith.constant 0 : index
    %158 = vector.load %arg9[%c0_99, %c0_100] : memref<32x256xf32, #tpu.memory_space<vmem>>, vector<32x256xf32>
    tpu.vector_store %arg9[%c0_99, %c0_100], %157 {strides = array<i32>} : memref<32x256xf32, #tpu.memory_space<vmem>>, vector<32x256xf32>,
    return
  }
  func.func @transform_0(%arg0: i32) -> (i32, i32) {
    %c0_i32 = arith.constant 0 : i32
    %c0_i32_0 = arith.constant 0 : i32
    return %arg0, %c0_i32 : i32, i32
  }
  func.func @transform_1(%arg0: i32) -> (i32, i32, i32, i32) {
    %c0_i32 = arith.constant 0 : i32
    %c0_i32_0 = arith.constant 0 : i32
    %c0_i32_1 = arith.constant 0 : i32
    %c0_i32_2 = arith.constant 0 : i32
    %c0_i32_3 = arith.constant 0 : i32
    return %c0_i32, %c0_i32_0, %c0_i32_1, %c0_i32_2 : i32, i32, i32, i32
  }
  func.func @transform_2(%arg0: i32) -> (i32, i32, i32, i32) {
    %c0_i32 = arith.constant 0 : i32
    %c0_i32_0 = arith.constant 0 : i32
    %c0_i32_1 = arith.constant 0 : i32
    %c0_i32_2 = arith.constant 0 : i32
    %c0_i32_3 = arith.constant 0 : i32
    return %c0_i32, %c0_i32_0, %c0_i32_1, %c0_i32_2 : i32, i32, i32, i32
  }
  func.func @transform_3(%arg0: i32) -> (i32, i32, i32, i32) {
    %c0_i32 = arith.constant 0 : i32
    %c0_i32_0 = arith.constant 0 : i32
    %c0_i32_1 = arith.constant 0 : i32
    %c0_i32_2 = arith.constant 0 : i32
    %c0_i32_3 = arith.constant 0 : i32
    return %c0_i32, %c0_i32_0, %c0_i32_1, %c0_i32_2 : i32, i32, i32, i32
  }
  func.func @transform_4(%arg0: i32) -> (i32, i32, i32, i32) {
    %c0_i32 = arith.constant 0 : i32
    %c0_i32_0 = arith.constant 0 : i32
    %c0_i32_1 = arith.constant 0 : i32
    %c0_i32_2 = arith.constant 0 : i32
    %c0_i32_3 = arith.constant 0 : i32
    return %c0_i32, %c0_i32_0, %c0_i32_1, %c0_i32_2 : i32, i32, i32, i32
  }
  func.func @transform_5(%arg0: i32) -> (i32, i32) {
    %c0_i32 = arith.constant 0 : i32
    %c0_i32_0 = arith.constant 0 : i32
    %c0_i32_1 = arith.constant 0 : i32
    return %c0_i32, %c0_i32_0 : i32, i32
  }
  func.func @transform_6(%arg0: i32) -> (i32, i32) {
    %c0_i32 = arith.constant 0 : i32
    %c0_i32_0 = arith.constant 0 : i32
    %c0_i32_1 = arith.constant 0 : i32
    return %c0_i32, %c0_i32_0 : i32, i32
  }
  func.func @transform_7(%arg0: i32) -> (i32, i32) {
    %c0_i32 = arith.constant 0 : i32
    %c0_i32_0 = arith.constant 0 : i32
    return %arg0, %c0_i32 : i32, i32
  }
  func.func @transform_8(%arg0: i32) -> (i32, i32) {
    %c0_i32 = arith.constant 0 : i32
    %c0_i32_0 = arith.constant 0 : i32
    return %arg0, %c0_i32 : i32, i32
  }
}

</mosaic_0001>

<llo_original>
// kernel: tpu_custom_call.1
$region0: #{tpu_custom_call.1}
  #allocation0 [shape = 'u32[]', space=smem, size = 0x4, offset = 0x4, fixed_abs, tag = 'smem constant byte address 0x4 - core index']
  #allocation1 [shape = 'u32[72,128]{1,0:T(1,128)}', space=vmem, size = 0x9000, scoped, tag = 'internal scratch']
  %s0 = inlined_call_operand.hbm [shape: f32[32,128], index: 0, kind: input, shape index: {}]
  %s1 = inlined_call_operand.hbm [shape: f32[2,2,1,128], index: 1, kind: input, shape index: {}]
  %s2 = inlined_call_operand.hbm [shape: f32[2,2,1,128], index: 2, kind: input, shape index: {}]
  %s3 = inlined_call_operand.hbm [shape: bf16[2,2,128,128], index: 3, kind: input, shape index: {}]
  %s4 = inlined_call_operand.hbm [shape: f32[2,2,1,128], index: 4, kind: input, shape index: {}]
  %s5 = inlined_call_operand.hbm [shape: bf16[128,256], index: 5, kind: input, shape index: {}]
  %s6 = inlined_call_operand.vmem [shape: f32[1,256], index: 6, kind: input, shape index: {}]
  %s7 = inlined_call_operand.hbm [shape: s8[32,256], index: 7, kind: input, shape index: {}]
  %s8 = inlined_call_operand.hbm [shape: f32[32,256], index: 8, kind: output, shape index: {}]
  %s9 = sld [smem:[#allocation0]]
  $region70: #{tpu_custom_call.1} parent=0
    _
  %s11 = ssub.s32 1, %s9
  %s12 = scalar_select 0, %s11, %s9
  $region1: #{tpu_custom_call.1} parent=0
    #allocation2 [shape = 'u8[16384]{0}', space=vmem, size = 0x4000, scoped, tag = 'input window, operand 0, single buffered']
    #allocation3 [shape = 's32[1]{0}', space=sflag, size = 0x4, scoped, tag = 'scoped memory for tpu_custom_call.1']
    #allocation4 [shape = 's32[1]{0}', space=sflag, size = 0x4, scoped, tag = 'scoped memory for tpu_custom_call.1']
    #allocation5 [shape = 'u8[2048]{0}', space=vmem, size = 0x800, scoped, tag = 'input window, operand 1, single buffered']
    #allocation6 [shape = 's32[1]{0}', space=sflag, size = 0x4, scoped, tag = 'scoped memory for tpu_custom_call.1']
    #allocation7 [shape = 'u8[2048]{0}', space=vmem, size = 0x800, scoped, tag = 'input window, operand 2, single buffered']
    #allocation8 [shape = 'u8[131072]{0}', space=vmem, size = 0x20000, scoped, tag = 'input window, operand 3, single buffered']
    #allocation9 [shape = 's32[1]{0}', space=sflag, size = 0x4, scoped, tag = 'scoped memory for tpu_custom_call.1']
    #allocation10 [shape = 'u8[2048]{0}', space=vmem, size = 0x800, scoped, tag = 'input window, operand 4, single buffered']
    #allocation11 [shape = 'u8[65536]{0}', space=vmem, size = 0x10000, scoped, tag = 'input window, operand 5, single buffered']
    #allocation12 [shape = 's32[1]{0}', space=sflag, size = 0x4, scoped, tag = 'scoped memory for tpu_custom_call.1']
    #allocation13 [shape = 'u8[8192]{0}', space=vmem, size = 0x2000, scoped, tag = 'input window, operand 7, single buffered']
    #allocation14 [shape = 'u8[32768]{0}', space=vmem, size = 0x8000, scoped, tag = 'output window, operand 0, single buffered']
    %13 = vsyncpa [#allocation3], 0
    %14 = vsyncpa [#allocation6], 0
    %15 = vsyncpa [#allocation9], 0
    %16 = vsyncpa [#allocation12], 0
    %17 = vsyncpa [#allocation4], 0
    // Predicated region
    $region2: #{tpu_custom_call.1} parent=1 // pred_check
      _
    $region3: #{tpu_custom_call.1} parent=1 // pred_check_branch
      %19 = sbr.rel (0) target = $region5
    $region4: #{tpu_custom_call.1} parent=1 // pred_region
      %21 = vsyncadd [#allocation3], 0
      %s22 = sshll.u32 %s0, 4
      %s23 = int_to_ptr.hbm [resolvable:$true] %s22
      %s24 = sshll.u32 [#allocation2], 4
      %s25 = int_to_ptr.vmem [resolvable:$true] %s24
      %30 = dma.hbm_to_vmem [thread:$0]  %s23, 512, %s25, [#allocation3], 128, 128, 8
    $region5: #{tpu_custom_call.1} parent=1 // pred_fallthru
      _
    // Predicated region
    $region6: #{tpu_custom_call.1} parent=1 // pred_check
      _
    $region7: #{tpu_custom_call.1} parent=1 // pred_check_branch
      %32 = sbr.rel (0) target = $region9
    $region8: #{tpu_custom_call.1} parent=1 // pred_region
      %34 = vsyncadd [#allocation6], 0
      %s35 = sshll.u32 %s1, 4
      %s36 = int_to_ptr.hbm [resolvable:$true] %s35
      %s37 = sshll.u32 [#allocation5], 4
      %s38 = int_to_ptr.vmem [resolvable:$true] %s37
      %43 = dma.hbm_to_vmem [thread:$0]  %s36, 64, %s38, [#allocation6], 16, 16, 1
    $region9: #{tpu_custom_call.1} parent=1 // pred_fallthru
      _
    // Predicated region
    $region10: #{tpu_custom_call.1} parent=1 // pred_check
      _
    $region11: #{tpu_custom_call.1} parent=1 // pred_check_branch
      %45 = sbr.rel (0) target = $region13
    $region12: #{tpu_custom_call.1} parent=1 // pred_region
      %47 = vsyncadd [#allocation6], 0
      %s48 = sshll.u32 %s2, 4
      %s49 = int_to_ptr.hbm [resolvable:$true] %s48
      %s50 = sshll.u32 [#allocation7], 4
      %s51 = int_to_ptr.vmem [resolvable:$true] %s50
      %56 = dma.hbm_to_vmem [thread:$0]  %s49, 64, %s51, [#allocation6], 16, 16, 1
    $region13: #{tpu_custom_call.1} parent=1 // pred_fallthru
      _
    // Predicated region
    $region14: #{tpu_custom_call.1} parent=1 // pred_check
      _
    $region15: #{tpu_custom_call.1} parent=1 // pred_check_branch
      %58 = sbr.rel (0) target = $region17
    $region16: #{tpu_custom_call.1} parent=1 // pred_region
      %60 = vsyncadd [#allocation9], 0
      %s61 = sshll.u32 %s3, 4
      %s62 = int_to_ptr.hbm [resolvable:$true] %s61
      %s63 = sshll.u32 [#allocation8], 4
      %s64 = int_to_ptr.vmem [resolvable:$true] %s63
      %69 = dma.hbm_to_vmem [thread:$0]  %s62, 4096, %s64, [#allocation9], 64, 64, 4
    $region17: #{tpu_custom_call.1} parent=1 // pred_fallthru
      _
    // Predicated region
    $region18: #{tpu_custom_call.1} parent=1 // pred_check
      _
    $region19: #{tpu_custom_call.1} parent=1 // pred_check_branch
      %71 = sbr.rel (0) target = $region21
    $region20: #{tpu_custom_call.1} parent=1 // pred_region
      %73 = vsyncadd [#allocation9], 0
      %s74 = sshll.u32 %s4, 4
      %s75 = int_to_ptr.hbm [resolvable:$true] %s74
      %s76 = sshll.u32 [#allocation10], 4
      %s77 = int_to_ptr.vmem [resolvable:$true] %s76
      %82 = dma.hbm_to_vmem [thread:$0]  %s75, 64, %s77, [#allocation9], 16, 16, 1
    $region21: #{tpu_custom_call.1} parent=1 // pred_fallthru
      _
    // Predicated region
    $region22: #{tpu_custom_call.1} parent=1 // pred_check
      _
    $region23: #{tpu_custom_call.1} parent=1 // pred_check_branch
      %84 = sbr.rel (0) target = $region25
    $region24: #{tpu_custom_call.1} parent=1 // pred_region
      %86 = vsyncadd [#allocation12], 0
      %s87 = sshll.u32 %s5, 4
      %s88 = int_to_ptr.hbm [resolvable:$true] %s87
      %s89 = sshll.u32 [#allocation11], 4
      %s90 = int_to_ptr.vmem [resolvable:$true] %s89
      %95 = dma.hbm_to_vmem [thread:$0]  %s88, 2048, %s90, [#allocation12], 128, 128, 8
    $region25: #{tpu_custom_call.1} parent=1 // pred_fallthru
      _
    // Predicated region
    $region26: #{tpu_custom_call.1} parent=1 // pred_check
      _
    $region27: #{tpu_custom_call.1} parent=1 // pred_check_branch
      %97 = sbr.rel (0) target = $region29
    $region28: #{tpu_custom_call.1} parent=1 // pred_region
      _
    $region29: #{tpu_custom_call.1} parent=1 // pred_fallthru
      _
    // Predicated region
    $region30: #{tpu_custom_call.1} parent=1 // pred_check
      _
    $region31: #{tpu_custom_call.1} parent=1 // pred_check_branch
      %99 = sbr.rel (0) target = $region33
    $region32: #{tpu_custom_call.1} parent=1 // pred_region
      %101 = vsyncadd [#allocation12], 0
      %s103 = sshll.u32 %s7, 4
      %s104 = int_to_ptr.hbm [resolvable:$true] %s103
      %s105 = sshll.u32 [#allocation13], 4
      %s106 = int_to_ptr.vmem [resolvable:$true] %s105
      %108 = dma.hbm_to_vmem [thread:$0]  %s104, 256, %s106, [#allocation12]
    $region33: #{tpu_custom_call.1} parent=1 // pred_fallthru
      _
    // Predicated region
    $region34: #{tpu_custom_call.1} parent=1 // pred_check
      _
    $region35: #{tpu_custom_call.1} parent=1 // pred_check_branch
      %110 = sbr.rel (0) target = $region37
    $region36: #{tpu_custom_call.1} parent=1 // pred_region
      %112 = dma.done [#allocation3], 512
    $region37: #{tpu_custom_call.1} parent=1 // pred_fallthru
      _
    // Predicated region
    $region38: #{tpu_custom_call.1} parent=1 // pred_check
      _
    $region39: #{tpu_custom_call.1} parent=1 // pred_check_branch
      %114 = sbr.rel (0) target = $region41
    $region40: #{tpu_custom_call.1} parent=1 // pred_region
      %116 = dma.done [#allocation6], 64
    $region41: #{tpu_custom_call.1} parent=1 // pred_fallthru
      _
    // Predicated region
    $region42: #{tpu_custom_call.1} parent=1 // pred_check
      _
    $region43: #{tpu_custom_call.1} parent=1 // pred_check_branch
      %118 = sbr.rel (0) target = $region45
    $region44: #{tpu_custom_call.1} parent=1 // pred_region
      %120 = dma.done [#allocation6], 64
    $region45: #{tpu_custom_call.1} parent=1 // pred_fallthru
      _
    // Predicated region
    $region46: #{tpu_custom_call.1} parent=1 // pred_check
      _
    $region47: #{tpu_custom_call.1} parent=1 // pred_check_branch
      %122 = sbr.rel (0) target = $region49
    $region48: #{tpu_custom_call.1} parent=1 // pred_region
      %124 = dma.done [#allocation9], 4096
    $region49: #{tpu_custom_call.1} parent=1 // pred_fallthru
      _
    // Predicated region
    $region50: #{tpu_custom_call.1} parent=1 // pred_check
      _
    $region51: #{tpu_custom_call.1} parent=1 // pred_check_branch
      %126 = sbr.rel (0) target = $region53
    $region52: #{tpu_custom_call.1} parent=1 // pred_region
      %128 = dma.done [#allocation9], 64
    $region53: #{tpu_custom_call.1} parent=1 // pred_fallthru
      _
    // Predicated region
    $region54: #{tpu_custom_call.1} parent=1 // pred_check
      _
    $region55: #{tpu_custom_call.1} parent=1 // pred_check_branch
      %130 = sbr.rel (0) target = $region57
    $region56: #{tpu_custom_call.1} parent=1 // pred_region
      %132 = dma.done [#allocation12], 2048
    $region57: #{tpu_custom_call.1} parent=1 // pred_fallthru
      _
    // Predicated region
    $region58: #{tpu_custom_call.1} parent=1 // pred_check
      _
    $region59: #{tpu_custom_call.1} parent=1 // pred_check_branch
      %134 = sbr.rel (0) target = $region61
    $region60: #{tpu_custom_call.1} parent=1 // pred_region
      %136 = dma.done [#allocation12], 256
    $region61: #{tpu_custom_call.1} parent=1 // pred_fallthru
      _
    %v139 = vld [vmem:[#allocation2] sm:$0xff]
    %v140 = vld [vmem:[#allocation2 + $0x8] sm:$0xff]
    %v141 = vld [vmem:[#allocation2 + $0x10] sm:$0xff]
    %v142 = vld [vmem:[#allocation2 + $0x18] sm:$0xff]
    %143 = vadd.xlane.f32.xlu0 %v139
    %v144 = vpop.xlane.xlu0 %143
    %145 = vadd.xlane.f32.xlu0 %v140
    %v146 = vpop.xlane.xlu0 %145
    %147 = vadd.xlane.f32.xlu0 %v141
    %v148 = vpop.xlane.xlu0 %147
    %149 = vadd.xlane.f32.xlu0 %v142
    %v150 = vpop.xlane.xlu0 %149
    %v151 = vrcp.pop 128.0
    %v152 = vmul.f32 128.0, %v151
    %v153 = vsub.f32 1.0, %v152
    %v154 = vmul.f32 %v151, %v153
    %v155 = vadd.f32 %v151, %v154
    %vm156 = vweird.f32 %v151
    %v157 = vsel %vm156, %v151, %v155
    %v158 = vmul.f32 %v144, %v157
    %v159 = vmul.f32 %v146, %v157
    %v160 = vmul.f32 %v148, %v157
    %v161 = vmul.f32 %v150, %v157
    %v162 = vmul.f32 %v139, %v139
    %v163 = vmul.f32 %v140, %v140
    %v164 = vmul.f32 %v141, %v141
    %v165 = vmul.f32 %v142, %v142
    %166 = vadd.xlane.f32.xlu0 %v162
    %v167 = vpop.xlane.xlu0 %166
    %168 = vadd.xlane.f32.xlu0 %v163
    %v169 = vpop.xlane.xlu0 %168
    %170 = vadd.xlane.f32.xlu0 %v164
    %v171 = vpop.xlane.xlu0 %170
    %172 = vadd.xlane.f32.xlu0 %v165
    %v173 = vpop.xlane.xlu0 %172
    %v174 = vmul.f32 %v167, %v157
    %v175 = vmul.f32 %v169, %v157
    %v176 = vmul.f32 %v171, %v157
    %v177 = vmul.f32 %v173, %v157
    %v178 = vmul.f32 %v158, %v158
    %v179 = vmul.f32 %v159, %v159
    %v180 = vmul.f32 %v160, %v160
    %v181 = vmul.f32 %v161, %v161
    %v182 = vsub.f32 %v174, %v178
    %v183 = vsub.f32 %v175, %v179
    %v184 = vsub.f32 %v176, %v180
    %v185 = vsub.f32 %v177, %v181
    %v186 = vsub.f32 %v139, %v158
    %v187 = vsub.f32 %v140, %v159
    %v188 = vsub.f32 %v141, %v160
    %v189 = vsub.f32 %v142, %v161
    %v190 = vadd.f32 %v182, 1e-05
    %v191 = vadd.f32 %v183, 1e-05
    %v192 = vadd.f32 %v184, 1e-05
    %v193 = vadd.f32 %v185, 1e-05
    %v194 = vrsqrt.pop %v190
    %v195 = vmul.f32 %v194, %v190
    %v196 = vmul.f32 %v195, %v194
    %v197 = vmul.f32 0.5, %v196
    %v198 = vsub.f32 1.5, %v197
    %v199 = vmul.f32 %v194, %v198
    %vm200 = vweird.f32 %v190
    %vm201 = vweird.f32 %v194
    %vm202 = vmor %vm200, %vm201
    %v203 = vsel %vm202, %v194, %v199
    %v204 = vrsqrt.pop %v191
    %v205 = vmul.f32 %v204, %v191
    %v206 = vmul.f32 %v205, %v204
    %v207 = vmul.f32 0.5, %v206
    %v208 = vsub.f32 1.5, %v207
    %v209 = vmul.f32 %v204, %v208
    %vm210 = vweird.f32 %v191
    %vm211 = vweird.f32 %v204
    %vm212 = vmor %vm210, %vm211
    %v213 = vsel %vm212, %v204, %v209
    %v214 = vrsqrt.pop %v192
    %v215 = vmul.f32 %v214, %v192
    %v216 = vmul.f32 %v215, %v214
    %v217 = vmul.f32 0.5, %v216
    %v218 = vsub.f32 1.5, %v217
    %v219 = vmul.f32 %v214, %v218
    %vm220 = vweird.f32 %v192
    %vm221 = vweird.f32 %v214
    %vm222 = vmor %vm220, %vm221
    %v223 = vsel %vm222, %v214, %v219
    %v224 = vrsqrt.pop %v193
    %v225 = vmul.f32 %v224, %v193
    %v226 = vmul.f32 %v225, %v224
    %v227 = vmul.f32 0.5, %v226
    %v228 = vsub.f32 1.5, %v227
    %v229 = vmul.f32 %v224, %v228
    %vm230 = vweird.f32 %v193
    %vm231 = vweird.f32 %v224
    %vm232 = vmor %vm230, %vm231
    %v233 = vsel %vm232, %v224, %v229
    %v234 = vmul.f32 %v186, %v203
    %v235 = vmul.f32 %v187, %v213
    %v236 = vmul.f32 %v188, %v223
    %v237 = vmul.f32 %v189, %v233
    %v238 = vld [vmem:[#allocation5] sm:$0x1]
    %v240 = vperm.slane %v238, 0
    %v242 = vmul.f32 %v234, %v240
    %v243 = vmul.f32 %v235, %v240
    %v244 = vmul.f32 %v236, %v240
    %v245 = vmul.f32 %v237, %v240
    %v246 = vld [vmem:[#allocation7] sm:$0x1]
    %v248 = vperm.slane %v246, 0
    %v250 = vadd.f32 %v242, %v248
    %v251 = vadd.f32 %v243, %v248
    %v252 = vadd.f32 %v244, %v248
    %v253 = vadd.f32 %v245, %v248
    %v254 = vmax.f32 %v250, 0.0
    %v255 = vmax.f32 %v251, 0.0
    %v256 = vmax.f32 %v252, 0.0
    %v257 = vmax.f32 %v253, 0.0
    %v258 = vpack.c.bf16 %v255, %v254
    %v259 = vpack.c.bf16 %v257, %v256
    %v260 = vld [vmem:[#allocation8] sm:$0xf]
    %v261 = vld [vmem:[#allocation8 + $0x4] sm:$0xf]
    %v262 = vld [vmem:[#allocation8 + $0x8] sm:$0xf]
    %v263 = vld [vmem:[#allocation8 + $0xc] sm:$0xf]
    %v264 = vld [vmem:[#allocation8 + $0x10] sm:$0xf]
    %v265 = vld [vmem:[#allocation8 + $0x14] sm:$0xf]
    %v266 = vld [vmem:[#allocation8 + $0x18] sm:$0xf]
    %v267 = vld [vmem:[#allocation8 + $0x1c] sm:$0xf]
    %v268 = vld [vmem:[#allocation8 + $0x20] sm:$0xf]
    %v269 = vld [vmem:[#allocation8 + $0x24] sm:$0xf]
    %v270 = vld [vmem:[#allocation8 + $0x28] sm:$0xf]
    %v271 = vld [vmem:[#allocation8 + $0x2c] sm:$0xf]
    %v272 = vld [vmem:[#allocation8 + $0x30] sm:$0xf]
    %v273 = vld [vmem:[#allocation8 + $0x34] sm:$0xf]
    %v274 = vld [vmem:[#allocation8 + $0x38] sm:$0xf]
    %v275 = vld [vmem:[#allocation8 + $0x3c] sm:$0xf]
    %v276 = vld [vmem:[#allocation10] sm:$0x1]
    %v278 = vperm.slane %v276, 0
    %v296 = vunpack.c.l.b16 %v260
    %v297 = vunpack.c.l.b16 %v261
    %v298 = vunpack.c.l.b16 %v262
    %v299 = vunpack.c.l.b16 %v263
    %v300 = vunpack.c.l.b16 %v264
    %v301 = vunpack.c.l.b16 %v265
    %v302 = vunpack.c.l.b16 %v266
    %v303 = vunpack.c.l.b16 %v267
    %v304 = vunpack.c.l.b16 %v268
    %v305 = vunpack.c.l.b16 %v269
    %v306 = vunpack.c.l.b16 %v270
    %v307 = vunpack.c.l.b16 %v271
    %v308 = vunpack.c.l.b16 %v272
    %v309 = vunpack.c.l.b16 %v273
    %v310 = vunpack.c.l.b16 %v274
    %v311 = vunpack.c.l.b16 %v275
    %v312 = vpack.c.b16 %v297, %v296
    %v313 = vpack.c.b16 %v299, %v298
    %v314 = vpack.c.b16 %v301, %v300
    %v315 = vpack.c.b16 %v303, %v302
    %v316 = vpack.c.b16 %v305, %v304
    %v317 = vpack.c.b16 %v307, %v306
    %v318 = vpack.c.b16 %v309, %v308
    %v319 = vpack.c.b16 %v311, %v310
    %328 = vmatpush.bf16.msra.mxu0 %v319
    %329 = vmatpush.bf16.msra.mxu0 %v318
    %330 = vmatpush.bf16.msra.mxu0 %v317
    %331 = vmatpush.bf16.msra.mxu0 %v316
    %332 = vmatpush.bf16.msra.mxu0 %v315
    %333 = vmatpush.bf16.msra.mxu0 %v314
    %334 = vmatpush.bf16.msra.mxu0 %v313
    %335 = vmatpush.bf16.msra.mxu0 %v312
    %336 = vmatmul.bf16.gmra.mxu0 %v258
    %v337 = vpop.f32.mrf.mxu0
    %v338 = vadd.f32 %v278, %v337
    %v339 = vpop.f32.mrf.mxu0
    %v340 = vadd.f32 %v278, %v339
    %341 = vmatmul.bf16.gmra.mxu0 %v259
    %v342 = vpop.f32.mrf.mxu0
    %v343 = vadd.f32 %v278, %v342
    %v344 = vpop.f32.mrf.mxu0
    %v345 = vadd.f32 %v278, %v344
    %346 = vdwg.mxu0
    %347 = vadd.xlane.f32.xlu0 %v338
    %v348 = vpop.xlane.xlu0 %347
    %349 = vadd.xlane.f32.xlu0 %v340
    %v350 = vpop.xlane.xlu0 %349
    %351 = vadd.xlane.f32.xlu0 %v343
    %v352 = vpop.xlane.xlu0 %351
    %353 = vadd.xlane.f32.xlu0 %v345
    %v354 = vpop.xlane.xlu0 %353
    %v355 = vmul.f32 %v348, %v157
    %v356 = vmul.f32 %v350, %v157
    %v357 = vmul.f32 %v352, %v157
    %v358 = vmul.f32 %v354, %v157
    %v359 = vmul.f32 %v338, %v338
    %v360 = vmul.f32 %v340, %v340
    %v361 = vmul.f32 %v343, %v343
    %v362 = vmul.f32 %v345, %v345
    %363 = vadd.xlane.f32.xlu0 %v359
    %v364 = vpop.xlane.xlu0 %363
    %365 = vadd.xlane.f32.xlu0 %v360
    %v366 = vpop.xlane.xlu0 %365
    %367 = vadd.xlane.f32.xlu0 %v361
    %v368 = vpop.xlane.xlu0 %367
    %369 = vadd.xlane.f32.xlu0 %v362
    %v370 = vpop.xlane.xlu0 %369
    %v371 = vmul.f32 %v364, %v157
    %v372 = vmul.f32 %v366, %v157
    %v373 = vmul.f32 %v368, %v157
    %v374 = vmul.f32 %v370, %v157
    %v375 = vmul.f32 %v355, %v355
    %v376 = vmul.f32 %v356, %v356
    %v377 = vmul.f32 %v357, %v357
    %v378 = vmul.f32 %v358, %v358
    %v379 = vsub.f32 %v371, %v375
    %v380 = vsub.f32 %v372, %v376
    %v381 = vsub.f32 %v373, %v377
    %v382 = vsub.f32 %v374, %v378
    %v383 = vsub.f32 %v338, %v355
    %v384 = vsub.f32 %v340, %v356
    %v385 = vsub.f32 %v343, %v357
    %v386 = vsub.f32 %v345, %v358
    %v387 = vadd.f32 %v379, 1e-05
    %v388 = vadd.f32 %v380, 1e-05
    %v389 = vadd.f32 %v381, 1e-05
    %v390 = vadd.f32 %v382, 1e-05
    %v391 = vrsqrt.pop %v387
    %v392 = vmul.f32 %v391, %v387
    %v393 = vmul.f32 %v392, %v391
    %v394 = vmul.f32 0.5, %v393
    %v395 = vsub.f32 1.5, %v394
    %v396 = vmul.f32 %v391, %v395
    %vm397 = vweird.f32 %v387
    %vm398 = vweird.f32 %v391
    %vm399 = vmor %vm397, %vm398
    %v400 = vsel %vm399, %v391, %v396
    %v401 = vrsqrt.pop %v388
    %v402 = vmul.f32 %v401, %v388
    %v403 = vmul.f32 %v402, %v401
    %v404 = vmul.f32 0.5, %v403
    %v405 = vsub.f32 1.5, %v404
    %v406 = vmul.f32 %v401, %v405
    %vm407 = vweird.f32 %v388
    %vm408 = vweird.f32 %v401
    %vm409 = vmor %vm407, %vm408
    %v410 = vsel %vm409, %v401, %v406
    %v411 = vrsqrt.pop %v389
    %v412 = vmul.f32 %v411, %v389
    %v413 = vmul.f32 %v412, %v411
    %v414 = vmul.f32 0.5, %v413
    %v415 = vsub.f32 1.5, %v414
    %v416 = vmul.f32 %v411, %v415
    %vm417 = vweird.f32 %v389
    %vm418 = vweird.f32 %v411
    %vm419 = vmor %vm417, %vm418
    %v420 = vsel %vm419, %v411, %v416
    %v421 = vrsqrt.pop %v390
    %v422 = vmul.f32 %v421, %v390
    %v423 = vmul.f32 %v422, %v421
    %v424 = vmul.f32 0.5, %v423
    %v425 = vsub.f32 1.5, %v424
    %v426 = vmul.f32 %v421, %v425
    %vm427 = vweird.f32 %v390
    %vm428 = vweird.f32 %v421
    %vm429 = vmor %vm427, %vm428
    %v430 = vsel %vm429, %v421, %v426
    %v431 = vmul.f32 %v383, %v400
    %v432 = vmul.f32 %v384, %v410
    %v433 = vmul.f32 %v385, %v420
    %v434 = vmul.f32 %v386, %v430
    %s435 = scalar_lea.vmem [#allocation5], 1
    %v436 = vld [vmem:[%s435] sm:$0x1]
    %v438 = vperm.slane %v436, 0
    %v440 = vmul.f32 %v431, %v438
    %v441 = vmul.f32 %v432, %v438
    %v442 = vmul.f32 %v433, %v438
    %v443 = vmul.f32 %v434, %v438
    %s444 = scalar_lea.vmem [#allocation7], 1
    %v445 = vld [vmem:[%s444] sm:$0x1]
    %v447 = vperm.slane %v445, 0
    %v449 = vadd.f32 %v440, %v447
    %v450 = vadd.f32 %v441, %v447
    %v451 = vadd.f32 %v442, %v447
    %v452 = vadd.f32 %v443, %v447
    %v453 = vmax.f32 %v449, 0.0
    %v454 = vmax.f32 %v450, 0.0
    %v455 = vmax.f32 %v451, 0.0
    %v456 = vmax.f32 %v452, 0.0
    %v457 = vpack.c.bf16 %v454, %v453
    %v458 = vpack.c.bf16 %v456, %v455
    %s459 = scalar_lea.vmem [#allocation8], 64
    %v460 = vld [vmem:[%s459] sm:$0xf]
    %v461 = vld [vmem:[%s459 + $0x4] sm:$0xf]
    %v462 = vld [vmem:[%s459 + $0x8] sm:$0xf]
    %v463 = vld [vmem:[%s459 + $0xc] sm:$0xf]
    %v464 = vld [vmem:[%s459 + $0x10] sm:$0xf]
    %v465 = vld [vmem:[%s459 + $0x14] sm:$0xf]
    %v466 = vld [vmem:[%s459 + $0x18] sm:$0xf]
    %v467 = vld [vmem:[%s459 + $0x1c] sm:$0xf]
    %v468 = vld [vmem:[%s459 + $0x20] sm:$0xf]
    %v469 = vld [vmem:[%s459 + $0x24] sm:$0xf]
    %v470 = vld [vmem:[%s459 + $0x28] sm:$0xf]
    %v471 = vld [vmem:[%s459 + $0x2c] sm:$0xf]
    %v472 = vld [vmem:[%s459 + $0x30] sm:$0xf]
    %v473 = vld [vmem:[%s459 + $0x34] sm:$0xf]
    %v474 = vld [vmem:[%s459 + $0x38] sm:$0xf]
    %v475 = vld [vmem:[%s459 + $0x3c] sm:$0xf]
    %s476 = scalar_lea.vmem [#allocation10], 1
    %v477 = vld [vmem:[%s476] sm:$0x1]
    %v479 = vperm.slane %v477, 0
    %v497 = vunpack.c.l.b16 %v460
    %v498 = vunpack.c.l.b16 %v461
    %v499 = vunpack.c.l.b16 %v462
    %v500 = vunpack.c.l.b16 %v463
    %v501 = vunpack.c.l.b16 %v464
    %v502 = vunpack.c.l.b16 %v465
    %v503 = vunpack.c.l.b16 %v466
    %v504 = vunpack.c.l.b16 %v467
    %v505 = vunpack.c.l.b16 %v468
    %v506 = vunpack.c.l.b16 %v469
    %v507 = vunpack.c.l.b16 %v470
    %v508 = vunpack.c.l.b16 %v471
    %v509 = vunpack.c.l.b16 %v472
    %v510 = vunpack.c.l.b16 %v473
    %v511 = vunpack.c.l.b16 %v474
    %v512 = vunpack.c.l.b16 %v475
    %v513 = vpack.c.b16 %v498, %v497
    %v514 = vpack.c.b16 %v500, %v499
    %v515 = vpack.c.b16 %v502, %v501
    %v516 = vpack.c.b16 %v504, %v503
    %v517 = vpack.c.b16 %v506, %v505
    %v518 = vpack.c.b16 %v508, %v507
    %v519 = vpack.c.b16 %v510, %v509
    %v520 = vpack.c.b16 %v512, %v511
    %529 = vmatpush.bf16.msra.mxu0 %v520
    %530 = vmatpush.bf16.msra.mxu0 %v519
    %531 = vmatpush.bf16.msra.mxu0 %v518
    %532 = vmatpush.bf16.msra.mxu0 %v517
    %533 = vmatpush.bf16.msra.mxu0 %v516
    %534 = vmatpush.bf16.msra.mxu0 %v515
    %535 = vmatpush.bf16.msra.mxu0 %v514
    %536 = vmatpush.bf16.msra.mxu0 %v513
    %537 = vmatmul.bf16.gmra.mxu0 %v457
    %v538 = vpop.f32.mrf.mxu0
    %v539 = vadd.f32 %v479, %v538
    %v540 = vpop.f32.mrf.mxu0
    %v541 = vadd.f32 %v479, %v540
    %542 = vmatmul.bf16.gmra.mxu0 %v458
    %v543 = vpop.f32.mrf.mxu0
    %v544 = vadd.f32 %v479, %v543
    %v545 = vpop.f32.mrf.mxu0
    %v546 = vadd.f32 %v479, %v545
    %547 = vdwg.mxu0
    %v548 = vadd.f32 %v539, %v139
    %v549 = vadd.f32 %v541, %v140
    %v550 = vadd.f32 %v544, %v141
    %v551 = vadd.f32 %v546, %v142
    %552 = vadd.xlane.f32.xlu0 %v548
    %v553 = vpop.xlane.xlu0 %552
    %554 = vadd.xlane.f32.xlu0 %v549
    %v555 = vpop.xlane.xlu0 %554
    %556 = vadd.xlane.f32.xlu0 %v550
    %v557 = vpop.xlane.xlu0 %556
    %558 = vadd.xlane.f32.xlu0 %v551
    %v559 = vpop.xlane.xlu0 %558
    %v560 = vmul.f32 %v553, %v157
    %v561 = vmul.f32 %v555, %v157
    %v562 = vmul.f32 %v557, %v157
    %v563 = vmul.f32 %v559, %v157
    %v564 = vmul.f32 %v548, %v548
    %v565 = vmul.f32 %v549, %v549
    %v566 = vmul.f32 %v550, %v550
    %v567 = vmul.f32 %v551, %v551
    %568 = vadd.xlane.f32.xlu0 %v564
    %v569 = vpop.xlane.xlu0 %568
    %570 = vadd.xlane.f32.xlu0 %v565
    %v571 = vpop.xlane.xlu0 %570
    %572 = vadd.xlane.f32.xlu0 %v566
    %v573 = vpop.xlane.xlu0 %572
    %574 = vadd.xlane.f32.xlu0 %v567
    %v575 = vpop.xlane.xlu0 %574
    %v576 = vmul.f32 %v569, %v157
    %v577 = vmul.f32 %v571, %v157
    %v578 = vmul.f32 %v573, %v157
    %v579 = vmul.f32 %v575, %v157
    %v580 = vmul.f32 %v560, %v560
    %v581 = vmul.f32 %v561, %v561
    %v582 = vmul.f32 %v562, %v562
    %v583 = vmul.f32 %v563, %v563
    %v584 = vsub.f32 %v576, %v580
    %v585 = vsub.f32 %v577, %v581
    %v586 = vsub.f32 %v578, %v582
    %v587 = vsub.f32 %v579, %v583
    %v588 = vsub.f32 %v548, %v560
    %v589 = vsub.f32 %v549, %v561
    %v590 = vsub.f32 %v550, %v562
    %v591 = vsub.f32 %v551, %v563
    %v592 = vadd.f32 %v584, 1e-05
    %v593 = vadd.f32 %v585, 1e-05
    %v594 = vadd.f32 %v586, 1e-05
    %v595 = vadd.f32 %v587, 1e-05
    %v596 = vrsqrt.pop %v592
    %v597 = vmul.f32 %v596, %v592
    %v598 = vmul.f32 %v597, %v596
    %v599 = vmul.f32 0.5, %v598
    %v600 = vsub.f32 1.5, %v599
    %v601 = vmul.f32 %v596, %v600
    %vm602 = vweird.f32 %v592
    %vm603 = vweird.f32 %v596
    %vm604 = vmor %vm602, %vm603
    %v605 = vsel %vm604, %v596, %v601
    %v606 = vrsqrt.pop %v593
    %v607 = vmul.f32 %v606, %v593
    %v608 = vmul.f32 %v607, %v606
    %v609 = vmul.f32 0.5, %v608
    %v610 = vsub.f32 1.5, %v609
    %v611 = vmul.f32 %v606, %v610
    %vm612 = vweird.f32 %v593
    %vm613 = vweird.f32 %v606
    %vm614 = vmor %vm612, %vm613
    %v615 = vsel %vm614, %v606, %v611
    %v616 = vrsqrt.pop %v594
    %v617 = vmul.f32 %v616, %v594
    %v618 = vmul.f32 %v617, %v616
    %v619 = vmul.f32 0.5, %v618
    %v620 = vsub.f32 1.5, %v619
    %v621 = vmul.f32 %v616, %v620
    %vm622 = vweird.f32 %v594
    %vm623 = vweird.f32 %v616
    %vm624 = vmor %vm622, %vm623
    %v625 = vsel %vm624, %v616, %v621
    %v626 = vrsqrt.pop %v595
    %v627 = vmul.f32 %v626, %v595
    %v628 = vmul.f32 %v627, %v626
    %v629 = vmul.f32 0.5, %v628
    %v630 = vsub.f32 1.5, %v629
    %v631 = vmul.f32 %v626, %v630
    %vm632 = vweird.f32 %v595
    %vm633 = vweird.f32 %v626
    %vm634 = vmor %vm632, %vm633
    %v635 = vsel %vm634, %v626, %v631
    %v636 = vmul.f32 %v588, %v605
    %v637 = vmul.f32 %v589, %v615
    %v638 = vmul.f32 %v590, %v625
    %v639 = vmul.f32 %v591, %v635
    %s640 = scalar_lea.vmem [#allocation5], 2
    %v641 = vld [vmem:[%s640] sm:$0x1]
    %v643 = vperm.slane %v641, 0
    %v645 = vmul.f32 %v636, %v643
    %v646 = vmul.f32 %v637, %v643
    %v647 = vmul.f32 %v638, %v643
    %v648 = vmul.f32 %v639, %v643
    %s649 = scalar_lea.vmem [#allocation7], 2
    %v650 = vld [vmem:[%s649] sm:$0x1]
    %v652 = vperm.slane %v650, 0
    %v654 = vadd.f32 %v645, %v652
    %v655 = vadd.f32 %v646, %v652
    %v656 = vadd.f32 %v647, %v652
    %v657 = vadd.f32 %v648, %v652
    %v658 = vmax.f32 %v654, 0.0
    %v659 = vmax.f32 %v655, 0.0
    %v660 = vmax.f32 %v656, 0.0
    %v661 = vmax.f32 %v657, 0.0
    %v662 = vpack.c.bf16 %v659, %v658
    %v663 = vpack.c.bf16 %v661, %v660
    %s664 = scalar_lea.vmem [#allocation8], 128
    %v665 = vld [vmem:[%s664] sm:$0xf]
    %v666 = vld [vmem:[%s664 + $0x4] sm:$0xf]
    %v667 = vld [vmem:[%s664 + $0x8] sm:$0xf]
    %v668 = vld [vmem:[%s664 + $0xc] sm:$0xf]
    %v669 = vld [vmem:[%s664 + $0x10] sm:$0xf]
    %v670 = vld [vmem:[%s664 + $0x14] sm:$0xf]
    %v671 = vld [vmem:[%s664 + $0x18] sm:$0xf]
    %v672 = vld [vmem:[%s664 + $0x1c] sm:$0xf]
    %v673 = vld [vmem:[%s664 + $0x20] sm:$0xf]
    %v674 = vld [vmem:[%s664 + $0x24] sm:$0xf]
    %v675 = vld [vmem:[%s664 + $0x28] sm:$0xf]
    %v676 = vld [vmem:[%s664 + $0x2c] sm:$0xf]
    %v677 = vld [vmem:[%s664 + $0x30] sm:$0xf]
    %v678 = vld [vmem:[%s664 + $0x34] sm:$0xf]
    %v679 = vld [vmem:[%s664 + $0x38] sm:$0xf]
    %v680 = vld [vmem:[%s664 + $0x3c] sm:$0xf]
    %s681 = scalar_lea.vmem [#allocation10], 2
    %v682 = vld [vmem:[%s681] sm:$0x1]
    %v684 = vperm.slane %v682, 0
    %v702 = vunpack.c.l.b16 %v665
    %v703 = vunpack.c.l.b16 %v666
    %v704 = vunpack.c.l.b16 %v667
    %v705 = vunpack.c.l.b16 %v668
    %v706 = vunpack.c.l.b16 %v669
    %v707 = vunpack.c.l.b16 %v670
    %v708 = vunpack.c.l.b16 %v671
    %v709 = vunpack.c.l.b16 %v672
    %v710 = vunpack.c.l.b16 %v673
    %v711 = vunpack.c.l.b16 %v674
    %v712 = vunpack.c.l.b16 %v675
    %v713 = vunpack.c.l.b16 %v676
    %v714 = vunpack.c.l.b16 %v677
    %v715 = vunpack.c.l.b16 %v678
    %v716 = vunpack.c.l.b16 %v679
    %v717 = vunpack.c.l.b16 %v680
    %v718 = vpack.c.b16 %v703, %v702
    %v719 = vpack.c.b16 %v705, %v704
    %v720 = vpack.c.b16 %v707, %v706
    %v721 = vpack.c.b16 %v709, %v708
    %v722 = vpack.c.b16 %v711, %v710
    %v723 = vpack.c.b16 %v713, %v712
    %v724 = vpack.c.b16 %v715, %v714
    %v725 = vpack.c.b16 %v717, %v716
    %734 = vmatpush.bf16.msra.mxu0 %v725
    %735 = vmatpush.bf16.msra.mxu0 %v724
    %736 = vmatpush.bf16.msra.mxu0 %v723
    %737 = vmatpush.bf16.msra.mxu0 %v722
    %738 = vmatpush.bf16.msra.mxu0 %v721
    %739 = vmatpush.bf16.msra.mxu0 %v720
    %740 = vmatpush.bf16.msra.mxu0 %v719
    %741 = vmatpush.bf16.msra.mxu0 %v718
    %742 = vmatmul.bf16.gmra.mxu0 %v662
    %v743 = vpop.f32.mrf.mxu0
    %v744 = vadd.f32 %v684, %v743
    %v745 = vpop.f32.mrf.mxu0
    %v746 = vadd.f32 %v684, %v745
    %747 = vmatmul.bf16.gmra.mxu0 %v663
    %v748 = vpop.f32.mrf.mxu0
    %v749 = vadd.f32 %v684, %v748
    %v750 = vpop.f32.mrf.mxu0
    %v751 = vadd.f32 %v684, %v750
    %752 = vdwg.mxu0
    %753 = vadd.xlane.f32.xlu0 %v744
    %v754 = vpop.xlane.xlu0 %753
    %755 = vadd.xlane.f32.xlu0 %v746
    %v756 = vpop.xlane.xlu0 %755
    %757 = vadd.xlane.f32.xlu0 %v749
    %v758 = vpop.xlane.xlu0 %757
    %759 = vadd.xlane.f32.xlu0 %v751
    %v760 = vpop.xlane.xlu0 %759
    %v761 = vmul.f32 %v754, %v157
    %v762 = vmul.f32 %v756, %v157
    %v763 = vmul.f32 %v758, %v157
    %v764 = vmul.f32 %v760, %v157
    %v765 = vmul.f32 %v744, %v744
    %v766 = vmul.f32 %v746, %v746
    %v767 = vmul.f32 %v749, %v749
    %v768 = vmul.f32 %v751, %v751
    %769 = vadd.xlane.f32.xlu0 %v765
    %v770 = vpop.xlane.xlu0 %769
    %771 = vadd.xlane.f32.xlu0 %v766
    %v772 = vpop.xlane.xlu0 %771
    %773 = vadd.xlane.f32.xlu0 %v767
    %v774 = vpop.xlane.xlu0 %773
    %775 = vadd.xlane.f32.xlu0 %v768
    %v776 = vpop.xlane.xlu0 %775
    %v777 = vmul.f32 %v770, %v157
    %v778 = vmul.f32 %v772, %v157
    %v779 = vmul.f32 %v774, %v157
    %v780 = vmul.f32 %v776, %v157
    %v781 = vmul.f32 %v761, %v761
    %v782 = vmul.f32 %v762, %v762
    %v783 = vmul.f32 %v763, %v763
    %v784 = vmul.f32 %v764, %v764
    %v785 = vsub.f32 %v777, %v781
    %v786 = vsub.f32 %v778, %v782
    %v787 = vsub.f32 %v779, %v783
    %v788 = vsub.f32 %v780, %v784
    %v789 = vsub.f32 %v744, %v761
    %v790 = vsub.f32 %v746, %v762
    %v791 = vsub.f32 %v749, %v763
    %v792 = vsub.f32 %v751, %v764
    %v793 = vadd.f32 %v785, 1e-05
    %v794 = vadd.f32 %v786, 1e-05
    %v795 = vadd.f32 %v787, 1e-05
    %v796 = vadd.f32 %v788, 1e-05
    %v797 = vrsqrt.pop %v793
    %v798 = vmul.f32 %v797, %v793
    %v799 = vmul.f32 %v798, %v797
    %v800 = vmul.f32 0.5, %v799
    %v801 = vsub.f32 1.5, %v800
    %v802 = vmul.f32 %v797, %v801
    %vm803 = vweird.f32 %v793
    %vm804 = vweird.f32 %v797
    %vm805 = vmor %vm803, %vm804
    %v806 = vsel %vm805, %v797, %v802
    %v807 = vrsqrt.pop %v794
    %v808 = vmul.f32 %v807, %v794
    %v809 = vmul.f32 %v808, %v807
    %v810 = vmul.f32 0.5, %v809
    %v811 = vsub.f32 1.5, %v810
    %v812 = vmul.f32 %v807, %v811
    %vm813 = vweird.f32 %v794
    %vm814 = vweird.f32 %v807
    %vm815 = vmor %vm813, %vm814
    %v816 = vsel %vm815, %v807, %v812
    %v817 = vrsqrt.pop %v795
    %v818 = vmul.f32 %v817, %v795
    %v819 = vmul.f32 %v818, %v817
    %v820 = vmul.f32 0.5, %v819
    %v821 = vsub.f32 1.5, %v820
    %v822 = vmul.f32 %v817, %v821
    %vm823 = vweird.f32 %v795
    %vm824 = vweird.f32 %v817
    %vm825 = vmor %vm823, %vm824
    %v826 = vsel %vm825, %v817, %v822
    %v827 = vrsqrt.pop %v796
    %v828 = vmul.f32 %v827, %v796
    %v829 = vmul.f32 %v828, %v827
    %v830 = vmul.f32 0.5, %v829
    %v831 = vsub.f32 1.5, %v830
    %v832 = vmul.f32 %v827, %v831
    %vm833 = vweird.f32 %v796
    %vm834 = vweird.f32 %v827
    %vm835 = vmor %vm833, %vm834
    %v836 = vsel %vm835, %v827, %v832
    %v837 = vmul.f32 %v789, %v806
    %v838 = vmul.f32 %v790, %v816
    %v839 = vmul.f32 %v791, %v826
    %v840 = vmul.f32 %v792, %v836
    %s841 = scalar_lea.vmem [#allocation5], 3
    %v842 = vld [vmem:[%s841] sm:$0x1]
    %v844 = vperm.slane %v842, 0
    %v846 = vmul.f32 %v837, %v844
    %v847 = vmul.f32 %v838, %v844
    %v848 = vmul.f32 %v839, %v844
    %v849 = vmul.f32 %v840, %v844
    %s850 = scalar_lea.vmem [#allocation7], 3
    %v851 = vld [vmem:[%s850] sm:$0x1]
    %v853 = vperm.slane %v851, 0
    %v855 = vadd.f32 %v846, %v853
    %v856 = vadd.f32 %v847, %v853
    %v857 = vadd.f32 %v848, %v853
    %v858 = vadd.f32 %v849, %v853
    %v859 = vmax.f32 %v855, 0.0
    %v860 = vmax.f32 %v856, 0.0
    %v861 = vmax.f32 %v857, 0.0
    %v862 = vmax.f32 %v858, 0.0
    %v863 = vpack.c.bf16 %v860, %v859
    %v864 = vpack.c.bf16 %v862, %v861
    %s865 = scalar_lea.vmem [#allocation8], 192
    %v866 = vld [vmem:[%s865] sm:$0xf]
    %v867 = vld [vmem:[%s865 + $0x4] sm:$0xf]
    %v868 = vld [vmem:[%s865 + $0x8] sm:$0xf]
    %v869 = vld [vmem:[%s865 + $0xc] sm:$0xf]
    %v870 = vld [vmem:[%s865 + $0x10] sm:$0xf]
    %v871 = vld [vmem:[%s865 + $0x14] sm:$0xf]
    %v872 = vld [vmem:[%s865 + $0x18] sm:$0xf]
    %v873 = vld [vmem:[%s865 + $0x1c] sm:$0xf]
    %v874 = vld [vmem:[%s865 + $0x20] sm:$0xf]
    %v875 = vld [vmem:[%s865 + $0x24] sm:$0xf]
    %v876 = vld [vmem:[%s865 + $0x28] sm:$0xf]
    %v877 = vld [vmem:[%s865 + $0x2c] sm:$0xf]
    %v878 = vld [vmem:[%s865 + $0x30] sm:$0xf]
    %v879 = vld [vmem:[%s865 + $0x34] sm:$0xf]
    %v880 = vld [vmem:[%s865 + $0x38] sm:$0xf]
    %v881 = vld [vmem:[%s865 + $0x3c] sm:$0xf]
    %s882 = scalar_lea.vmem [#allocation10], 3
    %v883 = vld [vmem:[%s882] sm:$0x1]
    %v885 = vperm.slane %v883, 0
    %v903 = vunpack.c.l.b16 %v866
    %v904 = vunpack.c.l.b16 %v867
    %v905 = vunpack.c.l.b16 %v868
    %v906 = vunpack.c.l.b16 %v869
    %v907 = vunpack.c.l.b16 %v870
    %v908 = vunpack.c.l.b16 %v871
    %v909 = vunpack.c.l.b16 %v872
    %v910 = vunpack.c.l.b16 %v873
    %v911 = vunpack.c.l.b16 %v874
    %v912 = vunpack.c.l.b16 %v875
    %v913 = vunpack.c.l.b16 %v876
    %v914 = vunpack.c.l.b16 %v877
    %v915 = vunpack.c.l.b16 %v878
    %v916 = vunpack.c.l.b16 %v879
    %v917 = vunpack.c.l.b16 %v880
    %v918 = vunpack.c.l.b16 %v881
    %v919 = vpack.c.b16 %v904, %v903
    %v920 = vpack.c.b16 %v906, %v905
    %v921 = vpack.c.b16 %v908, %v907
    %v922 = vpack.c.b16 %v910, %v909
    %v923 = vpack.c.b16 %v912, %v911
    %v924 = vpack.c.b16 %v914, %v913
    %v925 = vpack.c.b16 %v916, %v915
    %v926 = vpack.c.b16 %v918, %v917
    %935 = vmatpush.bf16.msra.mxu0 %v926
    %936 = vmatpush.bf16.msra.mxu0 %v925
    %937 = vmatpush.bf16.msra.mxu0 %v924
    %938 = vmatpush.bf16.msra.mxu0 %v923
    %939 = vmatpush.bf16.msra.mxu0 %v922
    %940 = vmatpush.bf16.msra.mxu0 %v921
    %941 = vmatpush.bf16.msra.mxu0 %v920
    %942 = vmatpush.bf16.msra.mxu0 %v919
    %943 = vmatmul.bf16.gmra.mxu0 %v863
    %v944 = vpop.f32.mrf.mxu0
    %v945 = vadd.f32 %v885, %v944
    %v946 = vpop.f32.mrf.mxu0
    %v947 = vadd.f32 %v885, %v946
    %948 = vmatmul.bf16.gmra.mxu0 %v864
    %v949 = vpop.f32.mrf.mxu0
    %v950 = vadd.f32 %v885, %v949
    %v951 = vpop.f32.mrf.mxu0
    %v952 = vadd.f32 %v885, %v951
    %953 = vdwg.mxu0
    %v954 = vadd.f32 %v945, %v548
    %v955 = vadd.f32 %v947, %v549
    %v956 = vadd.f32 %v950, %v550
    %v957 = vadd.f32 %v952, %v551
    %v958 = vpack.c.bf16 %v955, %v954
    %v959 = vpack.c.bf16 %v957, %v956
    %v960 = vld [vmem:[#allocation11] sm:$0xff]
    %v961 = vld [vmem:[#allocation11 + $0x8] sm:$0xff]
    %v962 = vld [vmem:[#allocation11 + $0x10] sm:$0xff]
    %v963 = vld [vmem:[#allocation11 + $0x18] sm:$0xff]
    %v964 = vld [vmem:[#allocation11 + $0x20] sm:$0xff]
    %v965 = vld [vmem:[#allocation11 + $0x28] sm:$0xff]
    %v966 = vld [vmem:[#allocation11 + $0x30] sm:$0xff]
    %v967 = vld [vmem:[#allocation11 + $0x38] sm:$0xff]
    %v968 = vld [vmem:[#allocation11 + $0x40] sm:$0xff]
    %v969 = vld [vmem:[#allocation11 + $0x48] sm:$0xff]
    %v970 = vld [vmem:[#allocation11 + $0x50] sm:$0xff]
    %v971 = vld [vmem:[#allocation11 + $0x58] sm:$0xff]
    %v972 = vld [vmem:[#allocation11 + $0x60] sm:$0xff]
    %v973 = vld [vmem:[#allocation11 + $0x68] sm:$0xff]
    %v974 = vld [vmem:[#allocation11 + $0x70] sm:$0xff]
    %v975 = vld [vmem:[#allocation11 + $0x78] sm:$0xff]
    %v976 = vld [vmem:[%s6] sm:$0x3]
    %v978 = vperm.slane %v976, 0
    %v979 = vperm.slane %v976, 1
    %v998 = vunpack.c.l.b16 %v960
    %v999 = vunpack.c.h.b16 %v960
    %v1000 = vunpack.c.l.b16 %v961
    %v1001 = vunpack.c.h.b16 %v961
    %v1002 = vunpack.c.l.b16 %v962
    %v1003 = vunpack.c.h.b16 %v962
    %v1004 = vunpack.c.l.b16 %v963
    %v1005 = vunpack.c.h.b16 %v963
    %v1006 = vunpack.c.l.b16 %v964
    %v1007 = vunpack.c.h.b16 %v964
    %v1008 = vunpack.c.l.b16 %v965
    %v1009 = vunpack.c.h.b16 %v965
    %v1010 = vunpack.c.l.b16 %v966
    %v1011 = vunpack.c.h.b16 %v966
    %v1012 = vunpack.c.l.b16 %v967
    %v1013 = vunpack.c.h.b16 %v967
    %v1014 = vunpack.c.l.b16 %v968
    %v1015 = vunpack.c.h.b16 %v968
    %v1016 = vunpack.c.l.b16 %v969
    %v1017 = vunpack.c.h.b16 %v969
    %v1018 = vunpack.c.l.b16 %v970
    %v1019 = vunpack.c.h.b16 %v970
    %v1020 = vunpack.c.l.b16 %v971
    %v1021 = vunpack.c.h.b16 %v971
    %v1022 = vunpack.c.l.b16 %v972
    %v1023 = vunpack.c.h.b16 %v972
    %v1024 = vunpack.c.l.b16 %v973
    %v1025 = vunpack.c.h.b16 %v973
    %v1026 = vunpack.c.l.b16 %v974
    %v1027 = vunpack.c.h.b16 %v974
    %v1028 = vunpack.c.l.b16 %v975
    %v1029 = vunpack.c.h.b16 %v975
    %v1030 = vpack.c.b16 %v1000, %v998
    %v1031 = vpack.c.b16 %v1001, %v999
    %v1032 = vpack.c.b16 %v1004, %v1002
    %v1033 = vpack.c.b16 %v1005, %v1003
    %v1034 = vpack.c.b16 %v1008, %v1006
    %v1035 = vpack.c.b16 %v1009, %v1007
    %v1036 = vpack.c.b16 %v1012, %v1010
    %v1037 = vpack.c.b16 %v1013, %v1011
    %v1038 = vpack.c.b16 %v1016, %v1014
    %v1039 = vpack.c.b16 %v1017, %v1015
    %v1040 = vpack.c.b16 %v1020, %v1018
    %v1041 = vpack.c.b16 %v1021, %v1019
    %v1042 = vpack.c.b16 %v1024, %v1022
    %v1043 = vpack.c.b16 %v1025, %v1023
    %v1044 = vpack.c.b16 %v1028, %v1026
    %v1045 = vpack.c.b16 %v1029, %v1027
    %1062 = vmatpush.bf16.msra.mxu0 %v1044
    %1063 = vmatpush.bf16.msra.mxu0 %v1042
    %1064 = vmatpush.bf16.msra.mxu0 %v1040
    %1065 = vmatpush.bf16.msra.mxu0 %v1038
    %1066 = vmatpush.bf16.msra.mxu0 %v1036
    %1067 = vmatpush.bf16.msra.mxu0 %v1034
    %1068 = vmatpush.bf16.msra.mxu0 %v1032
    %1069 = vmatpush.bf16.msra.mxu0 %v1030
    %1070 = vmatmul.bf16.gmra.mxu0 %v958
    %v1071 = vpop.f32.mrf.mxu0
    %v1072 = vadd.f32 %v978, %v1071
    %v1073 = vpop.f32.mrf.mxu0
    %v1074 = vadd.f32 %v978, %v1073
    %1075 = vmatmul.bf16.gmra.mxu0 %v959
    %v1076 = vpop.f32.mrf.mxu0
    %v1077 = vadd.f32 %v978, %v1076
    %v1078 = vpop.f32.mrf.mxu0
    %v1079 = vadd.f32 %v978, %v1078
    %1080 = vdwg.mxu0
    %1081 = vmatpush.bf16.msra.mxu0 %v1045
    %1082 = vmatpush.bf16.msra.mxu0 %v1043
    %1083 = vmatpush.bf16.msra.mxu0 %v1041
    %1084 = vmatpush.bf16.msra.mxu0 %v1039
    %1085 = vmatpush.bf16.msra.mxu0 %v1037
    %1086 = vmatpush.bf16.msra.mxu0 %v1035
    %1087 = vmatpush.bf16.msra.mxu0 %v1033
    %1088 = vmatpush.bf16.msra.mxu0 %v1031
    %1089 = vmatmul.bf16.gmra.mxu0 %v958
    %v1090 = vpop.f32.mrf.mxu0
    %v1091 = vadd.f32 %v979, %v1090
    %v1092 = vpop.f32.mrf.mxu0
    %v1093 = vadd.f32 %v979, %v1092
    %1094 = vmatmul.bf16.gmra.mxu0 %v959
    %v1095 = vpop.f32.mrf.mxu0
    %v1096 = vadd.f32 %v979, %v1095
    %v1097 = vpop.f32.mrf.mxu0
    %v1098 = vadd.f32 %v979, %v1097
    %1099 = vdwg.mxu0
    %v1100 = vld [vmem:[#allocation13] sm:$0xff]
    %v1101 = vld [vmem:[#allocation13 + $0x8] sm:$0xff]
    %vm1102 = vnez %v1100
    %vm1103 = vnez %v1101
    %v1104 = vsel %vm1102, 16843009, 0
    %v1105 = vsel %vm1103, 16843009, 0
    %v1106 = vunpack.c.0.s8 %v1104
    %v1107 = vunpack.c.0.s8 %v1105
    %v1108 = vunpack.c.1.s8 %v1104
    %v1109 = vunpack.c.1.s8 %v1105
    %v1110 = vunpack.c.2.s8 %v1104
    %v1111 = vunpack.c.2.s8 %v1105
    %v1112 = vunpack.c.3.s8 %v1104
    %v1113 = vunpack.c.3.s8 %v1105
    %v1114 = vpack.c.b16 %v1107, %v1106
    %v1115 = vpack.c.b8 %v1114, %v1114
    %v1116 = vpack.c.b16 %v1109, %v1108
    %v1117 = vpack.c.b8 %v1116, %v1116
    %v1118 = vpack.c.b16 %v1111, %v1110
    %v1119 = vpack.c.b8 %v1118, %v1118
    %v1120 = vpack.c.b16 %v1113, %v1112
    %v1121 = vpack.c.b8 %v1120, %v1120
    %vm1122 = vnez %v1115
    %vm1123 = vnez %v1117
    %vm1124 = vnez %v1119
    %vm1125 = vnez %v1121
    %v1126 = vsel %vm1122, 16843009, 0
    %v1127 = vsel %vm1123, 16843009, 0
    %v1128 = vsel %vm1124, 16843009, 0
    %v1129 = vsel %vm1125, 16843009, 0
    %v1130 = vunpack.c.0.s8 %v1126
    %v1131 = vunpack.c.1.s8 %v1126
    %v1132 = vunpack.c.0.s8 %v1127
    %v1133 = vunpack.c.1.s8 %v1127
    %v1134 = vunpack.c.0.s8 %v1128
    %v1135 = vunpack.c.1.s8 %v1128
    %v1136 = vunpack.c.0.s8 %v1129
    %v1137 = vunpack.c.1.s8 %v1129
    %vm1138 = vcmp.ne.s32.totalorder %v1130, 0
    %vm1139 = vcmp.ne.s32.totalorder %v1131, 0
    %vm1140 = vcmp.ne.s32.totalorder %v1132, 0
    %vm1141 = vcmp.ne.s32.totalorder %v1133, 0
    %vm1142 = vcmp.ne.s32.totalorder %v1134, 0
    %vm1143 = vcmp.ne.s32.totalorder %v1135, 0
    %vm1144 = vcmp.ne.s32.totalorder %v1136, 0
    %vm1145 = vcmp.ne.s32.totalorder %v1137, 0
    %v1146 = vsel %vm1138, -1e+09, %v1072
    %v1147 = vsel %vm1139, -1e+09, %v1091
    %v1148 = vsel %vm1140, -1e+09, %v1074
    %v1149 = vsel %vm1141, -1e+09, %v1093
    %v1150 = vsel %vm1142, -1e+09, %v1077
    %v1151 = vsel %vm1143, -1e+09, %v1096
    %v1152 = vsel %vm1144, -1e+09, %v1079
    %v1153 = vsel %vm1145, -1e+09, %v1098
    %1154 = vst [vmem:[#allocation14] sm:$0xff] %v1146
    %1155 = vst [vmem:[#allocation14 + $0x8] sm:$0xff] %v1147
    %1156 = vst [vmem:[#allocation14 + $0x10] sm:$0xff] %v1148
    %1157 = vst [vmem:[#allocation14 + $0x18] sm:$0xff] %v1149
    %1158 = vst [vmem:[#allocation14 + $0x20] sm:$0xff] %v1150
    %1159 = vst [vmem:[#allocation14 + $0x28] sm:$0xff] %v1151
    %1160 = vst [vmem:[#allocation14 + $0x30] sm:$0xff] %v1152
    %1161 = vst [vmem:[#allocation14 + $0x38] sm:$0xff] %v1153
    // Predicated region
    $region62: #{tpu_custom_call.1} parent=1 // pred_check
      _
    $region63: #{tpu_custom_call.1} parent=1 // pred_check_branch
      %1163 = sbr.rel (0) target = $region65
    $region64: #{tpu_custom_call.1} parent=1 // pred_region
      %1165 = vsyncadd [#allocation4], 0
      %s1166 = sshll.u32 [#allocation14], 4
      %s1167 = int_to_ptr.vmem [resolvable:$true] %s1166
      %s1168 = sshll.u32 %s8, 4
      %s1169 = int_to_ptr.hbm [resolvable:$true] %s1168
      %1174 = dma.vmem_to_hbm [thread:$0]  %s1167, 1024, %s1169, [#allocation4], 256, 256, 16
    $region65: #{tpu_custom_call.1} parent=1 // pred_fallthru
      _
    // Predicated region
    $region66: #{tpu_custom_call.1} parent=1 // pred_check
      _
    $region67: #{tpu_custom_call.1} parent=1 // pred_check_branch
      %1176 = sbr.rel (0) target = $region69
    $region68: #{tpu_custom_call.1} parent=1 // pred_region
      %1178 = dma.done [#allocation4], 1024
    $region69: #{tpu_custom_call.1} parent=1 // pred_fallthru
      _
    %1179 = vsyncpa [#allocation3], 1
    %1180 = vsyncpa [#allocation6], 1
    %1181 = vsyncpa [#allocation9], 1
    %1182 = vsyncpa [#allocation12], 1
    %1183 = vsyncpa [#allocation4], 1

</llo_original>
